<compile_context>
chip_gen: v6e
topology: v6e:2x2x1
jax: 0.10.0
libtpu: 0.0.40
codegen_flags: <defaults>
</compile_context>

<pallas_src>
import functools

import jax
import jax.numpy as jnp
from jax import lax
from jax.experimental import pallas as pl
from jax.experimental.pallas import tpu as pltpu


# -----------------------------------------------------------------------------
# Kernels
# -----------------------------------------------------------------------------
def _multiply_kernel(x_ref, w_ref, ref_ref, o_ref, *, contract_ref_first):
    """Resident-W path: one batch tile per grid step, W fully in VMEM.

    x_ref:   (TB, IN)  batch tile of x
    w_ref:   (E,  IN)  Linear weight in its original (out, in) layout
    ref_ref: (TB, E)   batch tile of ref
    o_ref:   (TB, 1)   output tile
    """
    x = x_ref[...]
    r = ref_ref[...]
    w = w_ref[...]
    if contract_ref_first:
        # t = ref @ W -> (TB, IN); MXU-native orientation (no W transpose).
        t = lax.dot_general(r, w, (((1,), (0,)), ((), ())),
                            preferred_element_type=jnp.float32)
        prod = t * x.astype(jnp.float32)
    else:
        # y = x @ W.T -> (TB, E); transpose folded into dot_general.
        y = lax.dot_general(x, w, (((1,), (1,)), ((), ())),
                            preferred_element_type=jnp.float32)
        prod = y * r.astype(jnp.float32)
    s = jnp.sum(prod, axis=1, keepdims=True)          # XLU lane reduce -> (TB, 1)
    o_ref[...] = jnp.tanh(s).astype(o_ref.dtype)      # EUP tanh


def _multiply_kernel_ktiled(x_ref, w_ref, ref_ref, o_ref, acc_ref, *,
                            contract_ref_first):
    """Large-W path: grid = (batch tiles, K tiles of the elementwise dim).

    contract_ref_first:  x_ref (TB, TK), w_ref (E, TK),  ref_ref (TB, E)
    otherwise:           x_ref (TB, IN), w_ref (TK, IN), ref_ref (TB, TK)
    acc_ref: (TB, 1) f32 running per-row partial sum.
    """
    k = pl.program_id(1)

    @pl.when(k == 0)
    def _init():
        acc_ref[...] = jnp.zeros_like(acc_ref)

    x = x_ref[...]
    r = ref_ref[...]
    w = w_ref[...]
    if contract_ref_first:
        t = lax.dot_general(r, w, (((1,), (0,)), ((), ())),
                            preferred_element_type=jnp.float32)   # (TB, TK)
        prod = t * x.astype(jnp.float32)
    else:
        y = lax.dot_general(x, w, (((1,), (1,)), ((), ())),
                            preferred_element_type=jnp.float32)   # (TB, TK)
        prod = y * r.astype(jnp.float32)
    acc_ref[...] += jnp.sum(prod, axis=1, keepdims=True)

    @pl.when(k == pl.num_programs(1) - 1)
    def _finish():
        o_ref[...] = jnp.tanh(acc_ref[...]).astype(o_ref.dtype)


# -----------------------------------------------------------------------------
# Tile sizing helpers
# -----------------------------------------------------------------------------
def _round_down(v, m):
    return (v // m) * m


def _round_up(v, m):
    return ((v + m - 1) // m) * m


def _vmem_params():
    """Return (physical VMEM bytes, VMEM budget for W + batch tiles)."""
    phys = None
    try:  # trace-time hardware query; wrapped for robustness across versions
        phys = int(pltpu.get_tpu_info().vmem_capacity_bytes)
    except Exception:
        phys = None
    if not phys:
        try:
            kind = jax.devices()[0].device_kind.lower()
            phys = (64 << 20) if ("v7" in kind or "7x" in kind) else (128 << 20)
        except Exception:
            phys = 64 << 20  # unknown: assume the smallest (v7x) to stay safe
    budget = (phys * 3) // 8  # headroom for double-buffering, temps, spills
    return phys, budget


def _pick_tb(tb, batch):
    """Clamp a VMEM-derived row count to a legal, pipeline-friendly tile."""
    tb = int(tb)
    if batch >= 16:
        # Keep >= 2 grid steps: DMA/compute overlap everywhere, and the
        # "parallel" batch axis can shard across both v7x TensorCores.
        tb = min(tb, _round_up(-(-batch // 2), 8))
    if tb >= batch:
        return batch            # full-extent block is always layout-legal
    return max(8, _round_down(tb, 8))


# -----------------------------------------------------------------------------
# Wrapper
# -----------------------------------------------------------------------------
def multiply_forward(x, w, ref):
    """x: (B, IN), w: (E, IN) Linear weight, ref: (B, E) -> (B, 1) float32."""
    B, IN = x.shape
    E, IN_w = w.shape
    assert IN_w == IN, (w.shape, x.shape)
    assert ref.shape == (B, E), (ref.shape, (B, E))

    phys, budget = _vmem_params()

    # Orientation of the first matmul.  Both are exact; pick the smaller
    # (TB, width) intermediate.  Ties go to ref @ W (contracting W's leading
    # dim), the MXU-native orientation that needs no W transpose.
    contract_ref_first = E >= IN

    x_isz = jnp.dtype(x.dtype).itemsize
    r_isz = jnp.dtype(ref.dtype).itemsize
    w_isz = jnp.dtype(w.dtype).itemsize

    # Conservative VMEM accounting: double-buffered x/ref DMA tiles plus f32
    # compute temps per row; W counted double-buffered in case Buffered(1) is
    # unavailable and the fallback spec is used.
    per_row = 2 * (IN * x_isz + E * r_isz) + 4 * (IN + E) + 8
    w_cost = 2 * E * IN * w_isz

    # ---- large-W path selection (mainly matters on v7x's 64 MiB VMEM) ------
    use_ktile, TK = False, None
    tiled_dim = IN if contract_ref_first else E      # elementwise dim
    other_dim = E if contract_ref_first else IN
    if w_cost + 8 * per_row > budget:
        n = 2
        while n * 128 <= tiled_dim:
            if tiled_dim % n == 0:
                tk = tiled_dim // n
                if tk % 128 == 0 and 2 * other_dim * tk * w_isz <= budget // 2:
                    use_ktile, TK = True, tk
                    break
            n += 1
        # If no suitable TK exists (tiled dim not a multiple of 128) we fall
        # back to the resident-W path with a raised vmem limit; extremely
        # large, oddly-shaped W would need host-side splitting.

    if use_ktile:
        xw = TK if contract_ref_first else IN
        rw = E if contract_ref_first else TK
        per_row_k = 2 * (xw * x_isz + rw * r_isz) + 4 * (xw + rw) + 8
        w_blk_cost = 2 * other_dim * TK * w_isz
        TB = _pick_tb(max(0, budget - w_blk_cost) // per_row_k, B)
        est = w_blk_cost + TB * per_row_k
    else:
        TB = _pick_tb(max(0, budget - w_cost) // per_row, B)
        est = w_cost + TB * per_row

    vmem_limit = int(min(phys * 9 // 10,
                         max(budget + budget // 4, est + est // 4 + (1 << 20))))

    kernel_kwargs = dict(contract_ref_first=contract_ref_first)
    out_shape = jax.ShapeDtypeStruct((B, 1), jnp.float32)

    if use_ktile:
        grid = (pl.cdiv(B, TB), tiled_dim // TK)
        if contract_ref_first:
            x_spec = pl.BlockSpec((TB, TK), lambda i, k: (i, k))
            w_spec = pl.BlockSpec((E, TK), lambda i, k: (0, k))
            r_spec = pl.BlockSpec((TB, E), lambda i, k: (i, 0))
        else:
            x_spec = pl.BlockSpec((TB, IN), lambda i, k: (i, 0))
            w_spec = pl.BlockSpec((TK, IN), lambda i, k: (k, 0))
            r_spec = pl.BlockSpec((TB, TK), lambda i, k: (i, k))
        out_spec = pl.BlockSpec((TB, 1), lambda i, k: (i, 0))
        return pl.pallas_call(
            functools.partial(_multiply_kernel_ktiled, **kernel_kwargs),
            out_shape=out_shape,
            grid_spec=pltpu.PrefetchScalarGridSpec(
                num_scalar_prefetch=0,
                grid=grid,
                in_specs=[x_spec, w_spec, r_spec],
                out_specs=out_spec,
                scratch_shapes=[pltpu.VMEM((TB, 1), jnp.float32)],
            ),
            compiler_params=pltpu.CompilerParams(
                dimension_semantics=("parallel", "arbitrary"),
                vmem_limit_bytes=vmem_limit,
            ),
        )(x, w, ref)

    # ---- resident-W path ----------------------------------------------------
    grid = (pl.cdiv(B, TB),)
    x_spec = pl.BlockSpec((TB, IN), lambda i: (i, 0))
    r_spec = pl.BlockSpec((TB, E), lambda i: (i, 0))
    out_spec = pl.BlockSpec((TB, 1), lambda i: (i, 0))

    def _call(w_spec):
        return pl.pallas_call(
            functools.partial(_multiply_kernel, **kernel_kwargs),
            out_shape=out_shape,
            grid_spec=pltpu.PrefetchScalarGridSpec(
                num_scalar_prefetch=0,
                grid=grid,
                in_specs=[x_spec, w_spec, r_spec],
                out_specs=out_spec,
            ),
            compiler_params=pltpu.CompilerParams(
                dimension_semantics=("parallel",),
                vmem_limit_bytes=vmem_limit,
            ),
        )(x, w, ref)

    try:
        # Invariant W (constant index_map) only needs a single VMEM buffer.
        return _call(pl.BlockSpec((E, IN), lambda i: (0, 0),
                                  pipeline_mode=pl.Buffered(1)))
    except Exception:
        # pipeline_mode / Buffered(1) not supported by this jax version:
        # fall back to the default (double-buffered) spec, already budgeted for.
        return _call(pl.BlockSpec((E, IN), lambda i: (0, 0)))


def multiply_reference(x, w, ref):
    y = x.astype(jnp.float32) @ w.astype(jnp.float32).T
    return jnp.tanh(jnp.sum(y * ref.astype(jnp.float32), axis=1, keepdims=True))


if __name__ == "__main__":
    key = jax.random.PRNGKey(0)

    # Small shapes consistent with the module: batch=8, in_size=32, embed_dim=32.
    B, IN_SIZE, EMBED_DIM = 8, 32, 32
    kx, kw, kr, k2 = jax.random.split(key, 4)
    x = jax.random.normal(kx, (B, IN_SIZE), dtype=jnp.float32)
    bound = 1.0 / (IN_SIZE ** 0.5)           # Linear default init range
    w = jax.random.uniform(kw, (EMBED_DIM, IN_SIZE), dtype=jnp.float32,
                           minval=-bound, maxval=bound)
    ref = jax.random.normal(kr, (B, EMBED_DIM), dtype=jnp.float32)

    out = jax.block_until_ready(multiply_forward(x, w, ref))
    expected = multiply_reference(x, w, ref)
    assert out.shape == (B, 1), out.shape
    assert jnp.allclose(out, expected, atol=1e-5, rtol=1e-5), (
        f"max err {jnp.max(jnp.abs(out - expected))}")

    # Second shape exercises the multi-tile batch grid and the x @ W.T branch.
    B2, IN2, E2 = 64, 48, 32
    ka, kb, kc = jax.random.split(k2, 3)
    x2 = jax.random.normal(ka, (B2, IN2), dtype=jnp.float32)
    b2 = 1.0 / (IN2 ** 0.5)
    w2 = jax.random.uniform(kb, (E2, IN2), dtype=jnp.float32,
                            minval=-b2, maxval=b2)
    ref2 = jax.random.normal(kc, (B2, E2), dtype=jnp.float32)
    out2 = jax.block_until_ready(multiply_forward(x2, w2, ref2))
    assert out2.shape == (B2, 1), out2.shape
    assert jnp.allclose(out2, multiply_reference(x2, w2, ref2),
                        atol=1e-5, rtol=1e-5), (
        f"max err {jnp.max(jnp.abs(out2 - multiply_reference(x2, w2, ref2)))}")

    print("KERNEL_OK")
</pallas_src>

<mosaic_0001>
module attributes {stable_mosaic.version = 11 : i64} {
  func.func @_multiply_kernel(%arg0: i32, %arg1: memref<8x32xf32, #tpu.memory_space<vmem>>, %arg2: memref<32x32xf32, #tpu.memory_space<vmem>>, %arg3: memref<8x32xf32, #tpu.memory_space<vmem>>, %arg4: memref<8x1xf32, #tpu.memory_space<vmem>>) attributes {dimension_semantics = [#tpu.dimension_semantics<parallel>], iteration_bounds = array<i64: 1>, scalar_prefetch = 0 : i64, scratch_operands = 0 : i64, tpu.core_type = #tpu.core_type<tc>, window_params = [{transform_indices = @transform_0, window_bounds = array<i64: 8, 32>}, {pipeline_mode = #tpu.pipeline_mode<synchronous>, transform_indices = @transform_1, window_bounds = array<i64: 32, 32>}, {transform_indices = @transform_2, window_bounds = array<i64: 8, 32>}, {transform_indices = @transform_3, window_bounds = array<i64: 8, 1>}]} {
    %c0 = arith.constant 0 : index
    %c0_0 = arith.constant 0 : index
    %0 = vector.load %arg1[%c0, %c0_0] : memref<8x32xf32, #tpu.memory_space<vmem>>, vector<8x32xf32>
    %c0_1 = arith.constant 0 : index
    %c0_2 = arith.constant 0 : index
    %1 = vector.load %arg3[%c0_1, %c0_2] : memref<8x32xf32, #tpu.memory_space<vmem>>, vector<8x32xf32>
    %c0_3 = arith.constant 0 : index
    %c0_4 = arith.constant 0 : index
    %2 = vector.load %arg2[%c0_3, %c0_4] : memref<32x32xf32, #tpu.memory_space<vmem>>, vector<32x32xf32>
    %cst = arith.constant dense<0.000000e+00> : vector<8x32xf32>
    %3 = tpu.matmul %1, %2, %cst {dimension_numbers = #tpu.dot_dimension_numbers<[1], [0], [0], [1], [0, 0, 1, 1], [], []>} : vector<8x32xf32>, vector<32x32xf32>, vector<8x32xf32> -> vector<8x32xf32>
    %4 = arith.mulf %3, %0 : vector<8x32xf32>
    %cst_5 = arith.constant dense<0.000000e+00> : vector<8xf32>
    %5 = vector.multi_reduction <add>, %4, %cst_5 [1] : vector<8x32xf32> to vector<8xf32>
    %6 = vector.shape_cast %5 : vector<8xf32> to vector<8x1xf32>
    %7 = math.tanh %6 : vector<8x1xf32>
    %c0_6 = arith.constant 0 : index
    %c0_7 = arith.constant 0 : index
    %8 = vector.load %arg4[%c0_6, %c0_7] : memref<8x1xf32, #tpu.memory_space<vmem>>, vector<8x1xf32>
    tpu.vector_store %arg4[%c0_6, %c0_7], %7 {strides = array<i32>} : memref<8x1xf32, #tpu.memory_space<vmem>>, vector<8x1xf32>,
    return
  }
  func.func @transform_0(%arg0: i32) -> (i32, i32) {
    %c0_i32 = arith.constant 0 : i32
    %c0_i32_0 = arith.constant 0 : i32
    return %arg0, %c0_i32 : i32, i32
  }
  func.func @transform_1(%arg0: i32) -> (i32, i32) {
    %c0_i32 = arith.constant 0 : i32
    %c0_i32_0 = arith.constant 0 : i32
    %c0_i32_1 = arith.constant 0 : i32
    return %c0_i32, %c0_i32_0 : i32, i32
  }
  func.func @transform_2(%arg0: i32) -> (i32, i32) {
    %c0_i32 = arith.constant 0 : i32
    %c0_i32_0 = arith.constant 0 : i32
    return %arg0, %c0_i32 : i32, i32
  }
  func.func @transform_3(%arg0: i32) -> (i32, i32) {
    %c0_i32 = arith.constant 0 : i32
    %c0_i32_0 = arith.constant 0 : i32
    return %arg0, %c0_i32 : i32, i32
  }
}

module attributes {stable_mosaic.version = 11 : i64} {
  func.func @_multiply_kernel(%arg0: i32, %arg1: memref<8x32xf32, #tpu.memory_space<vmem>>, %arg2: memref<32x32xf32, #tpu.memory_space<vmem>>, %arg3: memref<8x32xf32, #tpu.memory_space<vmem>>, %arg4: memref<8x1xf32, #tpu.memory_space<vmem>>) attributes {dimension_semantics = [#tpu.dimension_semantics<parallel>], iteration_bounds = array<i64: 1>, scalar_prefetch = 0 : i64, scratch_operands = 0 : i64, tpu.core_type = #tpu.core_type<tc>, window_params = [{transform_indices = @transform_0, window_bounds = array<i64: 8, 32>}, {pipeline_mode = #tpu.pipeline_mode<synchronous>, transform_indices = @transform_1, window_bounds = array<i64: 32, 32>}, {transform_indices = @transform_2, window_bounds = array<i64: 8, 32>}, {transform_indices = @transform_3, window_bounds = array<i64: 8, 1>}]} {
    %c0 = arith.constant 0 : index
    %c0_0 = arith.constant 0 : index
    %0 = vector.load %arg1[%c0, %c0_0] : memref<8x32xf32, #tpu.memory_space<vmem>>, vector<8x32xf32>
    %c0_1 = arith.constant 0 : index
    %c0_2 = arith.constant 0 : index
    %1 = vector.load %arg3[%c0_1, %c0_2] : memref<8x32xf32, #tpu.memory_space<vmem>>, vector<8x32xf32>
    %c0_3 = arith.constant 0 : index
    %c0_4 = arith.constant 0 : index
    %2 = vector.load %arg2[%c0_3, %c0_4] : memref<32x32xf32, #tpu.memory_space<vmem>>, vector<32x32xf32>
    %cst = arith.constant dense<0.000000e+00> : vector<8x32xf32>
    %3 = tpu.matmul %1, %2, %cst {dimension_numbers = #tpu.dot_dimension_numbers<[1], [0], [0], [1], [0, 0, 1, 1], [], []>} : vector<8x32xf32>, vector<32x32xf32>, vector<8x32xf32> -> vector<8x32xf32>
    %4 = arith.mulf %3, %0 : vector<8x32xf32>
    %cst_5 = arith.constant dense<0.000000e+00> : vector<8xf32>
    %5 = vector.multi_reduction <add>, %4, %cst_5 [1] : vector<8x32xf32> to vector<8xf32>
    %6 = vector.shape_cast %5 : vector<8xf32> to vector<8x1xf32>
    %7 = math.tanh %6 : vector<8x1xf32>
    %c0_6 = arith.constant 0 : index
    %c0_7 = arith.constant 0 : index
    %8 = vector.load %arg4[%c0_6, %c0_7] : memref<8x1xf32, #tpu.memory_space<vmem>>, vector<8x1xf32>
    tpu.vector_store %arg4[%c0_6, %c0_7], %7 {strides = array<i32>} : memref<8x1xf32, #tpu.memory_space<vmem>>, vector<8x1xf32>,
    return
  }
  func.func @transform_0(%arg0: i32) -> (i32, i32) {
    %c0_i32 = arith.constant 0 : i32
    %c0_i32_0 = arith.constant 0 : i32
    return %arg0, %c0_i32 : i32, i32
  }
  func.func @transform_1(%arg0: i32) -> (i32, i32) {
    %c0_i32 = arith.constant 0 : i32
    %c0_i32_0 = arith.constant 0 : i32
    %c0_i32_1 = arith.constant 0 : i32
    return %c0_i32, %c0_i32_0 : i32, i32
  }
  func.func @transform_2(%arg0: i32) -> (i32, i32) {
    %c0_i32 = arith.constant 0 : i32
    %c0_i32_0 = arith.constant 0 : i32
    return %arg0, %c0_i32 : i32, i32
  }
  func.func @transform_3(%arg0: i32) -> (i32, i32) {
    %c0_i32 = arith.constant 0 : i32
    %c0_i32_0 = arith.constant 0 : i32
    return %arg0, %c0_i32 : i32, i32
  }
}

</mosaic_0001>

<llo_original>
// kernel: tpu_custom_call.1
$region0: #{tpu_custom_call.1}
  #allocation0 [shape = 'u32[]', space=smem, size = 0x4, offset = 0x4, fixed_abs, tag = 'smem constant byte address 0x4 - core index']
  #allocation1 [shape = 'u32[144,128]{1,0:T(1,128)}', space=vmem, size = 0x12000, scoped, tag = 'internal scratch']
  %s0 = inlined_call_operand.hbm [shape: f32[8,32], index: 0, kind: input, shape index: {}]
  %s1 = inlined_call_operand.hbm [shape: f32[32,32], index: 1, kind: input, shape index: {}]
  %s2 = inlined_call_operand.hbm [shape: f32[8,32], index: 2, kind: input, shape index: {}]
  %s3 = inlined_call_operand.vmem [shape: f32[8,1], index: 3, kind: output, shape index: {}]
  %s4 = sld [smem:[#allocation0]]
  $region34: #{tpu_custom_call.1} parent=0
    _
  %s6 = ssub.s32 1, %s4
  %s7 = scalar_select 0, %s6, %s4
  $region1: #{tpu_custom_call.1} parent=0
    #allocation2 [shape = 'u8[4096]{0}', space=vmem, size = 0x1000, scoped, tag = 'input window, operand 0, single buffered']
    #allocation3 [shape = 's32[1]{0}', space=sflag, size = 0x4, scoped, tag = 'scoped memory for tpu_custom_call.1']
    #allocation4 [shape = 'u8[16384]{0}', space=vmem, size = 0x4000, scoped, tag = 'input window, operand 1, single buffered']
    #allocation5 [shape = 's32[1]{0}', space=sflag, size = 0x4, scoped, tag = 'scoped memory for tpu_custom_call.1']
    #allocation6 [shape = 'u8[4096]{0}', space=vmem, size = 0x1000, scoped, tag = 'input window, operand 2, single buffered']
    %8 = vsyncpa [#allocation3], 0
    %9 = vsyncpa [#allocation5], 0
    // Predicated region
    $region2: #{tpu_custom_call.1} parent=1 // pred_check
      _
    $region3: #{tpu_custom_call.1} parent=1 // pred_check_branch
      %11 = sbr.rel (0) target = $region5
    $region4: #{tpu_custom_call.1} parent=1 // pred_region
      %s13 = ssub.s32 128, 128
      %14 = vsyncadd [#allocation3], %s13
      %s16 = sshll.u32 [#allocation2], 4
      %s17 = int_to_ptr.vmem [resolvable:$true] %s16
      %19 = dma.hbm_to_vmem [thread:$0]  %s0, 128, %s17, [#allocation3]
    $region5: #{tpu_custom_call.1} parent=1 // pred_fallthru
      _
    // Predicated region
    $region6: #{tpu_custom_call.1} parent=1 // pred_check
      _
    $region7: #{tpu_custom_call.1} parent=1 // pred_check_branch
      %21 = sbr.rel (0) target = $region9
    $region8: #{tpu_custom_call.1} parent=1 // pred_region
      %s23 = ssub.s32 512, 512
      %24 = vsyncadd [#allocation5], %s23
      %s25 = sshll.u32 [#allocation4], 4
      %s26 = int_to_ptr.vmem [resolvable:$true] %s25
      %31 = dma.hbm_to_vmem [thread:$0]  %s1, 512, %s26, [#allocation5], 128, 128, 8
    $region9: #{tpu_custom_call.1} parent=1 // pred_fallthru
      _
    // Predicated region
    $region10: #{tpu_custom_call.1} parent=1 // pred_check
      _
    $region11: #{tpu_custom_call.1} parent=1 // pred_check_branch
      %33 = sbr.rel (0) target = $region13
    $region12: #{tpu_custom_call.1} parent=1 // pred_region
      %s35 = ssub.s32 128, 128
      %36 = vsyncadd [#allocation5], %s35
      %s38 = sshll.u32 [#allocation6], 4
      %s39 = int_to_ptr.vmem [resolvable:$true] %s38
      %41 = dma.hbm_to_vmem [thread:$0]  %s2, 128, %s39, [#allocation5]
    $region13: #{tpu_custom_call.1} parent=1 // pred_fallthru
      _
    // Predicated region
    $region14: #{tpu_custom_call.1} parent=1 // pred_check
      _
    $region15: #{tpu_custom_call.1} parent=1 // pred_check_branch
      %43 = sbr.rel (0) target = $region17
    $region16: #{tpu_custom_call.1} parent=1 // pred_region
      %44 = dma.done [#allocation3], 128
    $region17: #{tpu_custom_call.1} parent=1 // pred_fallthru
      _
    // Predicated region
    $region18: #{tpu_custom_call.1} parent=1 // pred_check
      _
    $region19: #{tpu_custom_call.1} parent=1 // pred_check_branch
      %46 = sbr.rel (0) target = $region21
    $region20: #{tpu_custom_call.1} parent=1 // pred_region
      %47 = dma.done [#allocation5], 512
    $region21: #{tpu_custom_call.1} parent=1 // pred_fallthru
      _
    // Predicated region
    $region22: #{tpu_custom_call.1} parent=1 // pred_check
      _
    $region23: #{tpu_custom_call.1} parent=1 // pred_check_branch
      %49 = sbr.rel (0) target = $region25
    $region24: #{tpu_custom_call.1} parent=1 // pred_region
      %50 = dma.done [#allocation5], 128
    $region25: #{tpu_custom_call.1} parent=1 // pred_fallthru
      _
    %v51 = vld [vmem:[#allocation2] sm:$0xff]
    %v52 = vld [vmem:[#allocation6] sm:$0xff]
    %v53 = vld [vmem:[#allocation4] sm:$0xff]
    %v54 = vld [vmem:[#allocation4 + $0x8] sm:$0xff]
    %v55 = vld [vmem:[#allocation4 + $0x10] sm:$0xff]
    %v56 = vld [vmem:[#allocation4 + $0x18] sm:$0xff]
    %vm57 = vcmask 261120
    %v59 = vsel %vm57, %v52, 0
    %61 = vmatprep.subr.mxu0 0.0
    %62 = vmatpush1.msra.mxu0 0.0
    %63 = vmatprep.subr.mxu0 0.0
    %64 = vmatpush1.msra.mxu0 0.0
    %65 = vmatprep.subr.mxu0 0.0
    %66 = vmatpush1.msra.mxu0 0.0
    %67 = vmatprep.subr.mxu0 0.0
    %68 = vmatpush1.msra.mxu0 0.0
    %69 = vmatprep.subr.mxu0 0.0
    %70 = vmatpush1.msra.mxu0 0.0
    %71 = vmatprep.subr.mxu0 0.0
    %72 = vmatpush1.msra.mxu0 0.0
    %73 = vmatprep.subr.mxu0 0.0
    %74 = vmatpush1.msra.mxu0 0.0
    %75 = vmatprep.subr.mxu0 0.0
    %76 = vmatpush1.msra.mxu0 0.0
    %77 = vmatprep.subr.mxu0 0.0
    %78 = vmatpush1.msra.mxu0 0.0
    %79 = vmatprep.subr.mxu0 0.0
    %80 = vmatpush1.msra.mxu0 0.0
    %81 = vmatprep.subr.mxu0 0.0
    %82 = vmatpush1.msra.mxu0 0.0
    %83 = vmatprep.subr.mxu0 0.0
    %84 = vmatpush1.msra.mxu0 0.0
    %85 = vmatprep.subr.mxu0 0.0
    %86 = vmatpush1.msra.mxu0 %v56
    %87 = vmatprep.subr.mxu0 0.0
    %88 = vmatpush1.msra.mxu0 %v55
    %89 = vmatprep.subr.mxu0 0.0
    %90 = vmatpush1.msra.mxu0 %v54
    %91 = vmatprep.subr.mxu0 0.0
    %92 = vmatpush1.msra.mxu0 %v53
    %93 = vmatprep.subr.mxu0 0.0
    %94 = vmatpush2.msra.mxu0 0.0
    %95 = vmatprep.subr.mxu0 0.0
    %96 = vmatpush2.msra.mxu0 0.0
    %97 = vmatprep.subr.mxu0 0.0
    %98 = vmatpush2.msra.mxu0 0.0
    %99 = vmatprep.subr.mxu0 0.0
    %100 = vmatpush2.msra.mxu0 0.0
    %101 = vmatprep.subr.mxu0 0.0
    %102 = vmatpush2.msra.mxu0 0.0
    %103 = vmatprep.subr.mxu0 0.0
    %104 = vmatpush2.msra.mxu0 0.0
    %105 = vmatprep.subr.mxu0 0.0
    %106 = vmatpush2.msra.mxu0 0.0
    %107 = vmatprep.subr.mxu0 0.0
    %108 = vmatpush2.msra.mxu0 0.0
    %109 = vmatprep.subr.mxu0 0.0
    %110 = vmatpush2.msra.mxu0 0.0
    %111 = vmatprep.subr.mxu0 0.0
    %112 = vmatpush2.msra.mxu0 0.0
    %113 = vmatprep.subr.mxu0 0.0
    %114 = vmatpush2.msra.mxu0 0.0
    %115 = vmatprep.subr.mxu0 0.0
    %116 = vmatpush2.msra.mxu0 0.0
    %117 = vmatprep.subr.mxu0 0.0
    %118 = vmatpush2.msra.mxu0 0.0
    %119 = vmatprep.subr.mxu0 0.0
    %120 = vmatpush2.msra.mxu0 0.0
    %121 = vmatprep.subr.mxu0 0.0
    %122 = vmatpush2.msra.mxu0 0.0
    %123 = vmatprep.subr.mxu0 0.0
    %124 = vmatpush2.msra.mxu0 0.0
    %125 = vmatprep.mubr.f32.mxu0 0.0
    %126 = vmatmul.mubr.f32.gmra.mxu0 %v59
    %v127 = vpop.f32.mrf.mxu0
    %v128 = vadd.f32 0.0, %v127
    %v129 = vpop.f32.mrf.mxu0
    %130 = vdwg.mxu0
    %v131 = vmul.f32 %v128, %v51
    %v132 = vsel %vm57, %v131, 0.0
    %133 = vadd.xlane.f32.xlu0 %v132
    %v134 = vpop.xlane.xlu0 %133
    %v135 = vtanh.pop %v134
    %vm136 = vcmask 7168
    %137 = vst.msk [vmem:[%s3] sm:$0xff] %vm136, %v135
    // Predicated region
    $region26: #{tpu_custom_call.1} parent=1 // pred_check
      _
    $region27: #{tpu_custom_call.1} parent=1 // pred_check_branch
      %139 = sbr.rel (0) target = $region29
    $region28: #{tpu_custom_call.1} parent=1 // pred_region
      _
    $region29: #{tpu_custom_call.1} parent=1 // pred_fallthru
      _
    // Predicated region
    $region30: #{tpu_custom_call.1} parent=1 // pred_check
      _
    $region31: #{tpu_custom_call.1} parent=1 // pred_check_branch
      %141 = sbr.rel (0) target = $region33
    $region32: #{tpu_custom_call.1} parent=1 // pred_region
      _
    $region33: #{tpu_custom_call.1} parent=1 // pred_fallthru
      _
    %142 = vsyncpa [#allocation3], 1
    %143 = vsyncpa [#allocation5], 1

// kernel: tpu_custom_call.1
$region0: #{tpu_custom_call.1}
  #allocation0 [shape = 'u32[]', space=smem, size = 0x4, offset = 0x4, fixed_abs, tag = 'smem constant byte address 0x4 - core index']
  #allocation1 [shape = 'u32[144,128]{1,0:T(1,128)}', space=vmem, size = 0x12000, scoped, tag = 'internal scratch']
  %s0 = inlined_call_operand.hbm [shape: f32[8,32], index: 0, kind: input, shape index: {}]
  %s1 = inlined_call_operand.hbm [shape: f32[32,32], index: 1, kind: input, shape index: {}]
  %s2 = inlined_call_operand.hbm [shape: f32[8,32], index: 2, kind: input, shape index: {}]
  %s3 = inlined_call_operand.vmem [shape: f32[8,1], index: 3, kind: output, shape index: {}]
  %s4 = sld [smem:[#allocation0]]
  $region34: #{tpu_custom_call.1} parent=0
    _
  %s6 = ssub.s32 1, %s4
  %s7 = scalar_select 0, %s6, %s4
  $region1: #{tpu_custom_call.1} parent=0
    #allocation2 [shape = 'u8[4096]{0}', space=vmem, size = 0x1000, scoped, tag = 'input window, operand 0, single buffered']
    #allocation3 [shape = 's32[1]{0}', space=sflag, size = 0x4, scoped, tag = 'scoped memory for tpu_custom_call.1']
    #allocation4 [shape = 'u8[16384]{0}', space=vmem, size = 0x4000, scoped, tag = 'input window, operand 1, single buffered']
    #allocation5 [shape = 's32[1]{0}', space=sflag, size = 0x4, scoped, tag = 'scoped memory for tpu_custom_call.1']
    #allocation6 [shape = 'u8[4096]{0}', space=vmem, size = 0x1000, scoped, tag = 'input window, operand 2, single buffered']
    %8 = vsyncpa [#allocation3], 0
    %9 = vsyncpa [#allocation5], 0
    // Predicated region
    $region2: #{tpu_custom_call.1} parent=1 // pred_check
      _
    $region3: #{tpu_custom_call.1} parent=1 // pred_check_branch
      %11 = sbr.rel (0) target = $region5
    $region4: #{tpu_custom_call.1} parent=1 // pred_region
      %s13 = ssub.s32 128, 128
      %14 = vsyncadd [#allocation3], %s13
      %s16 = sshll.u32 [#allocation2], 4
      %s17 = int_to_ptr.vmem [resolvable:$true] %s16
      %19 = dma.hbm_to_vmem [thread:$0]  %s0, 128, %s17, [#allocation3]
    $region5: #{tpu_custom_call.1} parent=1 // pred_fallthru
      _
    // Predicated region
    $region6: #{tpu_custom_call.1} parent=1 // pred_check
      _
    $region7: #{tpu_custom_call.1} parent=1 // pred_check_branch
      %21 = sbr.rel (0) target = $region9
    $region8: #{tpu_custom_call.1} parent=1 // pred_region
      %s23 = ssub.s32 512, 512
      %24 = vsyncadd [#allocation5], %s23
      %s25 = sshll.u32 [#allocation4], 4
      %s26 = int_to_ptr.vmem [resolvable:$true] %s25
      %31 = dma.hbm_to_vmem [thread:$0]  %s1, 512, %s26, [#allocation5], 128, 128, 8
    $region9: #{tpu_custom_call.1} parent=1 // pred_fallthru
      _
    // Predicated region
    $region10: #{tpu_custom_call.1} parent=1 // pred_check
      _
    $region11: #{tpu_custom_call.1} parent=1 // pred_check_branch
      %33 = sbr.rel (0) target = $region13
    $region12: #{tpu_custom_call.1} parent=1 // pred_region
      %s35 = ssub.s32 128, 128
      %36 = vsyncadd [#allocation5], %s35
      %s38 = sshll.u32 [#allocation6], 4
      %s39 = int_to_ptr.vmem [resolvable:$true] %s38
      %41 = dma.hbm_to_vmem [thread:$0]  %s2, 128, %s39, [#allocation5]
    $region13: #{tpu_custom_call.1} parent=1 // pred_fallthru
      _
    // Predicated region
    $region14: #{tpu_custom_call.1} parent=1 // pred_check
      _
    $region15: #{tpu_custom_call.1} parent=1 // pred_check_branch
      %43 = sbr.rel (0) target = $region17
    $region16: #{tpu_custom_call.1} parent=1 // pred_region
      %44 = dma.done [#allocation3], 128
    $region17: #{tpu_custom_call.1} parent=1 // pred_fallthru
      _
    // Predicated region
    $region18: #{tpu_custom_call.1} parent=1 // pred_check
      _
    $region19: #{tpu_custom_call.1} parent=1 // pred_check_branch
      %46 = sbr.rel (0) target = $region21
    $region20: #{tpu_custom_call.1} parent=1 // pred_region
      %47 = dma.done [#allocation5], 512
    $region21: #{tpu_custom_call.1} parent=1 // pred_fallthru
      _
    // Predicated region
    $region22: #{tpu_custom_call.1} parent=1 // pred_check
      _
    $region23: #{tpu_custom_call.1} parent=1 // pred_check_branch
      %49 = sbr.rel (0) target = $region25
    $region24: #{tpu_custom_call.1} parent=1 // pred_region
      %50 = dma.done [#allocation5], 128
    $region25: #{tpu_custom_call.1} parent=1 // pred_fallthru
      _
    %v51 = vld [vmem:[#allocation2] sm:$0xff]
    %v52 = vld [vmem:[#allocation6] sm:$0xff]
    %v53 = vld [vmem:[#allocation4] sm:$0xff]
    %v54 = vld [vmem:[#allocation4 + $0x8] sm:$0xff]
    %v55 = vld [vmem:[#allocation4 + $0x10] sm:$0xff]
    %v56 = vld [vmem:[#allocation4 + $0x18] sm:$0xff]
    %vm57 = vcmask 261120
    %v59 = vsel %vm57, %v52, 0
    %61 = vmatprep.subr.mxu0 0.0
    %62 = vmatpush1.msra.mxu0 0.0
    %63 = vmatprep.subr.mxu0 0.0
    %64 = vmatpush1.msra.mxu0 0.0
    %65 = vmatprep.subr.mxu0 0.0
    %66 = vmatpush1.msra.mxu0 0.0
    %67 = vmatprep.subr.mxu0 0.0
    %68 = vmatpush1.msra.mxu0 0.0
    %69 = vmatprep.subr.mxu0 0.0
    %70 = vmatpush1.msra.mxu0 0.0
    %71 = vmatprep.subr.mxu0 0.0
    %72 = vmatpush1.msra.mxu0 0.0
    %73 = vmatprep.subr.mxu0 0.0
    %74 = vmatpush1.msra.mxu0 0.0
    %75 = vmatprep.subr.mxu0 0.0
    %76 = vmatpush1.msra.mxu0 0.0
    %77 = vmatprep.subr.mxu0 0.0
    %78 = vmatpush1.msra.mxu0 0.0
    %79 = vmatprep.subr.mxu0 0.0
    %80 = vmatpush1.msra.mxu0 0.0
    %81 = vmatprep.subr.mxu0 0.0
    %82 = vmatpush1.msra.mxu0 0.0
    %83 = vmatprep.subr.mxu0 0.0
    %84 = vmatpush1.msra.mxu0 0.0
    %85 = vmatprep.subr.mxu0 0.0
    %86 = vmatpush1.msra.mxu0 %v56
    %87 = vmatprep.subr.mxu0 0.0
    %88 = vmatpush1.msra.mxu0 %v55
    %89 = vmatprep.subr.mxu0 0.0
    %90 = vmatpush1.msra.mxu0 %v54
    %91 = vmatprep.subr.mxu0 0.0
    %92 = vmatpush1.msra.mxu0 %v53
    %93 = vmatprep.subr.mxu0 0.0
    %94 = vmatpush2.msra.mxu0 0.0
    %95 = vmatprep.subr.mxu0 0.0
    %96 = vmatpush2.msra.mxu0 0.0
    %97 = vmatprep.subr.mxu0 0.0
    %98 = vmatpush2.msra.mxu0 0.0
    %99 = vmatprep.subr.mxu0 0.0
    %100 = vmatpush2.msra.mxu0 0.0
    %101 = vmatprep.subr.mxu0 0.0
    %102 = vmatpush2.msra.mxu0 0.0
    %103 = vmatprep.subr.mxu0 0.0
    %104 = vmatpush2.msra.mxu0 0.0
    %105 = vmatprep.subr.mxu0 0.0
    %106 = vmatpush2.msra.mxu0 0.0
    %107 = vmatprep.subr.mxu0 0.0
    %108 = vmatpush2.msra.mxu0 0.0
    %109 = vmatprep.subr.mxu0 0.0
    %110 = vmatpush2.msra.mxu0 0.0
    %111 = vmatprep.subr.mxu0 0.0
    %112 = vmatpush2.msra.mxu0 0.0
    %113 = vmatprep.subr.mxu0 0.0
    %114 = vmatpush2.msra.mxu0 0.0
    %115 = vmatprep.subr.mxu0 0.0
    %116 = vmatpush2.msra.mxu0 0.0
    %117 = vmatprep.subr.mxu0 0.0
    %118 = vmatpush2.msra.mxu0 0.0
    %119 = vmatprep.subr.mxu0 0.0
    %120 = vmatpush2.msra.mxu0 0.0
    %121 = vmatprep.subr.mxu0 0.0
    %122 = vmatpush2.msra.mxu0 0.0
    %123 = vmatprep.subr.mxu0 0.0
    %124 = vmatpush2.msra.mxu0 0.0
    %125 = vmatprep.mubr.f32.mxu0 0.0
    %126 = vmatmul.mubr.f32.gmra.mxu0 %v59
    %v127 = vpop.f32.mrf.mxu0
    %v128 = vadd.f32 0.0, %v127
    %v129 = vpop.f32.mrf.mxu0
    %130 = vdwg.mxu0
    %v131 = vmul.f32 %v128, %v51
    %v132 = vsel %vm57, %v131, 0.0
    %133 = vadd.xlane.f32.xlu0 %v132
    %v134 = vpop.xlane.xlu0 %133
    %v135 = vtanh.pop %v134
    %vm136 = vcmask 7168
    %137 = vst.msk [vmem:[%s3] sm:$0xff] %vm136, %v135
    // Predicated region
    $region26: #{tpu_custom_call.1} parent=1 // pred_check
      _
    $region27: #{tpu_custom_call.1} parent=1 // pred_check_branch
      %139 = sbr.rel (0) target = $region29
    $region28: #{tpu_custom_call.1} parent=1 // pred_region
      _
    $region29: #{tpu_custom_call.1} parent=1 // pred_fallthru
      _
    // Predicated region
    $region30: #{tpu_custom_call.1} parent=1 // pred_check
      _
    $region31: #{tpu_custom_call.1} parent=1 // pred_check_branch
      %141 = sbr.rel (0) target = $region33
    $region32: #{tpu_custom_call.1} parent=1 // pred_region
      _
    $region33: #{tpu_custom_call.1} parent=1 // pred_fallthru
      _
    %142 = vsyncpa [#allocation3], 1
    %143 = vsyncpa [#allocation5], 1

</llo_original>
